<compile_context>
chip_gen: v6e
topology: v6e:2x2x1
jax: 0.10.0
libtpu: 0.0.40
codegen_flags: <defaults>
</compile_context>

<pallas_src>
import functools

import jax
import jax.numpy as jnp
from jax.experimental import pallas as pl
from jax.experimental.pallas import tpu as pltpu


# --------------------------------------------------------------------------
# Kernel: identity copy of the current block.
# --------------------------------------------------------------------------
def _copy_kernel(x_ref, o_ref):
    o_ref[...] = x_ref[...]


# --------------------------------------------------------------------------
# Helpers.
# --------------------------------------------------------------------------
def _sublane(itemsize):
    # Native packed sublane tile: 8 (f32/i32), 16 (bf16/f16), 32 (i8/fp8).
    return max(8, 32 // int(itemsize))


@functools.lru_cache(maxsize=None)
def _tile_bytes():
    """Generation-aware per-block budget for the materializing copy:
    ~8 MiB on v5e/v6e (128 MiB VMEM), ~4 MiB on v7x (64 MiB VMEM)."""
    vmem = 64 * 1024 * 1024
    try:
        vmem = int(pltpu.get_tpu_info().vmem_capacity_bytes)
    except Exception:  # off-TPU tracing / API differences: stay conservative
        pass
    return max(2 * 1024 * 1024, min(8 * 1024 * 1024, vmem // 16))


def _resolve_shape(shape, numel):
    """Resolve a single -1 like torch.Tensor.view does."""
    shape = list(shape)
    if -1 in shape:
        idx = shape.index(-1)
        known = 1
        for j, s in enumerate(shape):
            if j != idx:
                known *= int(s)
        assert known and numel % known == 0, "view shape incompatible with input"
        shape[idx] = numel // known
    total = 1
    for s in shape:
        total *= int(s)
    assert total == numel, "view shape incompatible with input size"
    return tuple(int(s) for s in shape)


def _canonical_2d(x):
    """Free metadata reshape to a lane-friendly 2-D layout (numel > 0)."""
    numel = int(x.size)
    if numel % 128 == 0 and numel >= 128:
        return jnp.reshape(x, (numel // 128, 128))
    if x.ndim >= 2:
        return jnp.reshape(x, (numel // x.shape[-1], x.shape[-1]))
    return jnp.reshape(x, (1, numel))


def _touch_block(shape, itemsize):
    """Minimal fully-in-bounds, lowering-legal block for `shape`."""
    nd = len(shape)
    if nd == 1:
        n = shape[0]
        return (128,) if n >= 128 else (n,)
    sub = _sublane(itemsize)
    d2, d1 = shape[-2], shape[-1]
    b1 = 128 if d1 >= 128 else d1          # divisible by 128, or full dim
    b2 = sub if d2 >= sub else d2          # divisible by 8/16/32, or full dim
    return (1,) * (nd - 2) + (b2, b1)


# --------------------------------------------------------------------------
# Fast path: in-place "touch" — alias output onto input, write one tiny block.
# --------------------------------------------------------------------------
def _alias_touch(x):
    shape = tuple(int(s) for s in x.shape)
    itemsize = jnp.dtype(x.dtype).itemsize
    block = _touch_block(shape, itemsize)
    nd = len(shape)
    zeros = (0,) * nd
    index_map = lambda i: zeros

    block_bytes = itemsize
    for b in block:
        block_bytes *= int(b)

    return pl.pallas_call(
        _copy_kernel,
        out_shape=jax.ShapeDtypeStruct(shape, x.dtype),
        grid_spec=pltpu.PrefetchScalarGridSpec(
            num_scalar_prefetch=0,
            grid=(1,),
            in_specs=[pl.BlockSpec(block, index_map)],
            out_specs=pl.BlockSpec(block, index_map),
        ),
        # The whole point: the output IS the input's buffer (or XLA's copy of
        # it), so HBM traffic is ~block_bytes instead of 2 * numel bytes.
        input_output_aliases={0: 0},
        cost_estimate=pl.CostEstimate(
            flops=0, transcendentals=0, bytes_accessed=2 * block_bytes),
        compiler_params=pltpu.CompilerParams(
            dimension_semantics=("arbitrary",)),
    )(x)


# --------------------------------------------------------------------------
# Optional materializing copy: fresh buffer, roofline-tuned streaming copy.
# --------------------------------------------------------------------------
_LANE_CANDIDATES = (8192, 4096, 2048, 1024, 512, 256, 128)


def _choose_copy_layout(numel, itemsize):
    """Pick (rows, lanes, block_rows): rows*lanes == numel, block_rows | rows.

    Prefers multi-step (>=2 grid steps, pipelined + megacore-friendly) layouts
    maximizing block bytes; falls back to a single whole-array block.
    Returns None if numel has no multiple-of-128 factorization."""
    sub = _sublane(itemsize)
    tile = _tile_bytes()
    best = None  # (score, rows, lanes, block_rows); score = (pipelined?, bytes)
    for lanes in _LANE_CANDIDATES:
        if numel % lanes:
            continue
        rows = numel // lanes
        row_bytes = lanes * itemsize
        if rows % sub == 0 and rows >= 2 * sub:
            cap = min(rows // 2, max(sub, (tile // row_bytes) // sub * sub))
            b = (cap // sub) * sub
            while b >= sub:
                if rows % b == 0:
                    score = (1, b * row_bytes)
                    if best is None or score > best[0]:
                        best = (score, rows, lanes, b)
                    break
                b -= sub
        if rows * row_bytes <= tile:
            score = (0, rows * row_bytes)
            if best is None or score > best[0]:
                best = (score, rows, lanes, rows)
    if best is None:
        return None
    return best[1], best[2], best[3]


def _materializing_copy(x):
    numel = int(x.size)
    itemsize = jnp.dtype(x.dtype).itemsize
    layout = _choose_copy_layout(numel, itemsize)
    if layout is None:
        # No pad-free lane-dense factorization; a fresh full copy is not
        # required for view semantics, so fall back to the in-place touch.
        # TODO(synk): masked-tail streaming copy for ragged sizes.
        return _alias_touch(_canonical_2d(x))
    rows, lanes, block_rows = layout
    x2 = jnp.reshape(x, (rows, lanes))
    nbytes = numel * itemsize
    return pl.pallas_call(
        _copy_kernel,
        out_shape=jax.ShapeDtypeStruct((rows, lanes), x.dtype),
        grid_spec=pltpu.PrefetchScalarGridSpec(
            num_scalar_prefetch=0,
            grid=(rows // block_rows,),
            in_specs=[pl.BlockSpec((block_rows, lanes), lambda i: (i, 0))],
            out_specs=pl.BlockSpec((block_rows, lanes), lambda i: (i, 0)),
        ),
        cost_estimate=pl.CostEstimate(
            flops=0, transcendentals=0, bytes_accessed=2 * nbytes),
        compiler_params=pltpu.CompilerParams(
            dimension_semantics=("parallel",),
            vmem_limit_bytes=int(4.5 * _tile_bytes()),
        ),
    )(x2)


# --------------------------------------------------------------------------
# Module.
# --------------------------------------------------------------------------
class View:
    """JAX/Pallas equivalent of the PyTorch View module (x.view(*shape))."""

    def __init__(self, shape, materialize=False):
        self.shape = tuple(shape)
        self.materialize = bool(materialize)

    def __call__(self, x):
        numel = int(x.size)
        target = _resolve_shape(self.shape, numel)
        if numel == 0:
            return jnp.reshape(x, target)
        if self.materialize:
            out = _materializing_copy(x)
        else:
            out = _alias_touch(_canonical_2d(x))
        return jnp.reshape(out, target)


# --------------------------------------------------------------------------
# Self-test.
# --------------------------------------------------------------------------
if __name__ == "__main__":
    key = jax.random.PRNGKey(0)
    k1, k2, k3, k4, k5 = jax.random.split(key, 5)

    # 1) Small NCHW input (batch=2, channels=4, spatial=16x16), eager path
    #    (non-donated live input: XLA inserts the defensive copy, result is
    #    still exactly the input bytes).
    x = jax.random.normal(k1, (2, 4, 16, 16), dtype=jnp.float32)
    view = View((2, -1))
    y = jax.block_until_ready(view(x))
    assert y.shape == (2, 4 * 16 * 16) and y.dtype == x.dtype
    assert bool(jnp.all(y == jnp.reshape(x, (2, -1))))

    # 2) Inside jit where the View input is a temporary: the alias is a true
    #    in-place view with ~zero HBM traffic (the main optimization target).
    @jax.jit
    def fused(v):
        h = v * 2.0
        return View((v.shape[0], -1))(h)

    y2 = jax.block_until_ready(fused(x))
    assert bool(jnp.all(y2 == jnp.reshape(x * 2.0, (2, -1))))

    # 3) bf16 exercises the dtype-aware (16, 128) touch block.
    xb = jax.random.normal(k2, (2, 8, 16, 16), jnp.float32).astype(jnp.bfloat16)
    yb = jax.block_until_ready(View((-1, 16 * 16))(xb))
    assert yb.dtype == jnp.bfloat16
    assert bool(jnp.all(yb == jnp.reshape(xb, (-1, 256))))

    # 4) Ragged size (numel not a multiple of 128): no pad / no full copy,
    #    just one tiny in-bounds block.
    xr = jax.random.normal(k3, (3, 5, 7), dtype=jnp.float32)
    yr = jax.block_until_ready(View((5, 21))(xr))
    assert bool(jnp.all(yr == jnp.reshape(xr, (5, 21))))

    # 5) 1-D ragged input.
    x1 = jax.random.normal(k4, (97,), dtype=jnp.float32)
    y1 = jax.block_until_ready(View((97, 1))(x1))
    assert bool(jnp.all(y1 == jnp.reshape(x1, (97, 1))))

    # 6) Materializing copy path: fresh buffer, multi-step pipelined grid.
    xm = jax.random.normal(k5, (8, 16, 64, 128), dtype=jnp.float32)  # 4 MiB
    ym = jax.block_until_ready(View((8, -1), materialize=True)(xm))
    assert ym.shape == (8, 16 * 64 * 128)
    assert bool(jnp.all(ym == jnp.reshape(xm, (8, -1))))

    # 6b) Tiny materializing copy (exercises the 2-step (8,128) layout).
    ys = jax.block_until_ready(View((2, -1), materialize=True)(x))
    assert bool(jnp.all(ys == jnp.reshape(x, (2, -1))))

    print("KERNEL_OK")
</pallas_src>

<mosaic_0001>
module attributes {stable_mosaic.version = 11 : i64} {
  func.func @_copy_kernel(%arg0: i32, %arg1: memref<8x128xf32, #tpu.memory_space<vmem>>, %arg2: memref<8x128xf32, #tpu.memory_space<vmem>>) attributes {dimension_semantics = [#tpu.dimension_semantics<arbitrary>], iteration_bounds = array<i64: 1>, scalar_prefetch = 0 : i64, scratch_operands = 0 : i64, tpu.core_type = #tpu.core_type<tc>, window_params = [{transform_indices = @transform_0, window_bounds = array<i64: 8, 128>}, {transform_indices = @transform_1, window_bounds = array<i64: 8, 128>}]} {
    %c0 = arith.constant 0 : index
    %c0_0 = arith.constant 0 : index
    %0 = vector.load %arg1[%c0, %c0_0] : memref<8x128xf32, #tpu.memory_space<vmem>>, vector<8x128xf32>
    %c0_1 = arith.constant 0 : index
    %c0_2 = arith.constant 0 : index
    %1 = vector.load %arg2[%c0_1, %c0_2] : memref<8x128xf32, #tpu.memory_space<vmem>>, vector<8x128xf32>
    tpu.vector_store %arg2[%c0_1, %c0_2], %0 {strides = array<i32>} : memref<8x128xf32, #tpu.memory_space<vmem>>, vector<8x128xf32>,
    return
  }
  func.func @transform_0(%arg0: i32) -> (i32, i32) {
    %c0_i32 = arith.constant 0 : i32
    %c0_i32_0 = arith.constant 0 : i32
    %c0_i32_1 = arith.constant 0 : i32
    return %c0_i32, %c0_i32_0 : i32, i32
  }
  func.func @transform_1(%arg0: i32) -> (i32, i32) {
    %c0_i32 = arith.constant 0 : i32
    %c0_i32_0 = arith.constant 0 : i32
    %c0_i32_1 = arith.constant 0 : i32
    return %c0_i32, %c0_i32_0 : i32, i32
  }
}

</mosaic_0001>

<llo_original>
// kernel: tpu_custom_call.1
$region0: #{tpu_custom_call.1}
  #allocation0 [shape = 'u32[]', space=smem, size = 0x4, offset = 0x4, fixed_abs, tag = 'smem constant byte address 0x4 - core index']
  #allocation1 [shape = 'u32[144,128]{1,0:T(1,128)}', space=vmem, size = 0x12000, scoped, tag = 'internal scratch']
  %s0 = inlined_call_operand.hbm [shape: f32[16,128], index: 0, kind: input, shape index: {}, may-alias: {0,1}]
  %s1 = inlined_call_operand.hbm [shape: f32[16,128], index: 1, kind: output, shape index: {}, may-alias: {0,1}]
  %s2 = sld [smem:[#allocation0]]
  $region18: #{tpu_custom_call.1} parent=0
    _
  %s4 = ssub.s32 1, %s2
  %s5 = scalar_select 0, %s4, %s2
  $region1: #{tpu_custom_call.1} parent=0
    #allocation2 [shape = 'u8[4096]{0}', space=vmem, size = 0x1000, scoped, tag = 'input window, operand 0, single buffered']
    #allocation3 [shape = 's32[1]{0}', space=sflag, size = 0x4, scoped, tag = 'scoped memory for tpu_custom_call.1']
    #allocation4 [shape = 's32[1]{0}', space=sflag, size = 0x4, scoped, tag = 'scoped memory for tpu_custom_call.1']
    #allocation5 [shape = 'u8[4096]{0}', space=vmem, size = 0x1000, scoped, tag = 'output window, operand 0, single buffered']
    %6 = vsyncpa [#allocation3], 0
    %7 = vsyncpa [#allocation4], 0
    // Predicated region
    $region2: #{tpu_custom_call.1} parent=1 // pred_check
      _
    $region3: #{tpu_custom_call.1} parent=1 // pred_check_branch
      %9 = sbr.rel (0) target = $region5
    $region4: #{tpu_custom_call.1} parent=1 // pred_region
      %s11 = ssub.s32 128, 128
      %12 = vsyncadd [#allocation3], %s11
      %s14 = sshll.u32 [#allocation2], 4
      %s15 = int_to_ptr.vmem [resolvable:$true] %s14
      %17 = dma.hbm_to_vmem [thread:$0]  %s0, 128, %s15, [#allocation3]
    $region5: #{tpu_custom_call.1} parent=1 // pred_fallthru
      _
    // Predicated region
    $region6: #{tpu_custom_call.1} parent=1 // pred_check
      _
    $region7: #{tpu_custom_call.1} parent=1 // pred_check_branch
      %19 = sbr.rel (0) target = $region9
    $region8: #{tpu_custom_call.1} parent=1 // pred_region
      %20 = dma.done [#allocation3], 128
    $region9: #{tpu_custom_call.1} parent=1 // pred_fallthru
      _
    %v21 = vld [vmem:[#allocation2] sm:$0xff]
    %22 = vst [vmem:[#allocation5] sm:$0xff] %v21
    // Predicated region
    $region10: #{tpu_custom_call.1} parent=1 // pred_check
      _
    $region11: #{tpu_custom_call.1} parent=1 // pred_check_branch
      %24 = sbr.rel (0) target = $region13
    $region12: #{tpu_custom_call.1} parent=1 // pred_region
      %s26 = ssub.s32 128, 128
      %27 = vsyncadd [#allocation4], %s26
      %s29 = sshll.u32 [#allocation5], 4
      %s30 = int_to_ptr.vmem [resolvable:$true] %s29
      %32 = dma.vmem_to_hbm [thread:$0]  %s30, 128, %s1, [#allocation4]
    $region13: #{tpu_custom_call.1} parent=1 // pred_fallthru
      _
    // Predicated region
    $region14: #{tpu_custom_call.1} parent=1 // pred_check
      _
    $region15: #{tpu_custom_call.1} parent=1 // pred_check_branch
      %34 = sbr.rel (0) target = $region17
    $region16: #{tpu_custom_call.1} parent=1 // pred_region
      %35 = dma.done [#allocation4], 128
    $region17: #{tpu_custom_call.1} parent=1 // pred_fallthru
      _
    %36 = vsyncpa [#allocation3], 1
    %37 = vsyncpa [#allocation4], 1

</llo_original>
